<compile_context>
chip_gen: v7x
topology: tpu7x:2x2x1
jax: 0.10.0
libtpu: 0.0.40
codegen_flags: <defaults>
</compile_context>

<pallas_src>
import functools

import jax
import jax.numpy as jnp
from jax import lax
from jax.experimental import pallas as pl
from jax.experimental.pallas import tpu as pltpu

EPS = 1e-5
PRECISION = lax.Precision.HIGHEST  # reference only


# ----------------------------------------------------------------------------
# Pallas kernel: one grid step = Nb lane-concatenated batch samples.
# ----------------------------------------------------------------------------
def st_gcn_kernel(x_ref, w1_ref, wt_ref, a_ref, o_ref, *,
                  t_len, v_nodes, elementwise_bf16):
    """Shapes (TV = T*V, MV = Nb*TV, CG = Cin+1 padded to a multiple of 8):
       x_ref : (Nb, CG, TV)        bf16  channels + ones channel (+ zero pad channels)
       w1_ref: (2*Cout, (K+1)*CG)  bf16  [gcn + BN1 folded ; residual + BNr folded]
       wt_ref: (Cout, kt*Cout + 1) bf16  temporal conv + BN2 folded, last col = bias
       a_ref : (MV, K*MV)          bf16  kron(I_{Nb*T}, A[k]) lane-concatenated over k
       o_ref : (Nb, Cout, TV)
    """
    nb, cg, tv = x_ref.shape
    mv = nb * tv
    cout = w1_ref.shape[0] // 2
    K = w1_ref.shape[1] // cg - 1
    kt = (wt_ref.shape[1] - 1) // cout
    pad = (kt - 1) // 2
    cdt = jnp.bfloat16 if elementwise_bf16 else jnp.float32

    # ---- lane-concat the Nb samples: (CG, Nb*TV); everything below is lane-dense ----
    if nb == 1:
        x_cat = x_ref[0]
    else:
        x_cat = jnp.concatenate([x_ref[n] for n in range(nb)], axis=1)

    # ---- graph aggregation FIRST (Cin < Cout): one MXU pass, K branches fused on the
    #      output lane axis, contraction = Nb*TV ---------------------------------------
    xa = jnp.dot(x_cat, a_ref[...], preferred_element_type=jnp.float32)   # (CG, K*MV)

    # ---- fused channel mix: K gcn branches + BN1 and residual 1x1 + BNr in ONE matmul;
    #      all biases / BN shifts ride on the ones channel of x -------------------------
    rhs = jnp.concatenate(
        [xa[:, k * mv:(k + 1) * mv].astype(jnp.bfloat16) for k in range(K)] + [x_cat],
        axis=0)                                                           # ((K+1)*CG, MV)
    proj = jnp.dot(w1_ref[...], rhs, preferred_element_type=jnp.float32)  # (2*Cout, MV)

    res = proj[cout:, :]                                    # residual branch (BNr folded)
    h = jnp.maximum(proj[:cout, :], 0.0).astype(cdt)        # ReLU(BN1(gcn))

    # ---- temporal (kt x 1) conv via lane-roll im2col -> one matmul --------------------
    cols = []
    if kt > 1:  # boundary iota hoisted out of the dt loop
        tv_in = lax.broadcasted_iota(jnp.int32, (cout, mv), 1) % tv
    for dt in range(kt):                                    # kt is small & static
        d = dt - pad
        if d == 0:
            cols.append(h)
        else:
            rolled = pltpu.roll(h, shift=(-d * v_nodes) % mv, axis=1)
            if d > 0:
                mask = tv_in < (t_len - d) * v_nodes        # per-sample time mask
            else:
                mask = tv_in >= (-d) * v_nodes
            cols.append(jnp.where(mask, rolled, jnp.zeros_like(rolled)))
    cols.append(jnp.ones((1, mv), cdt))                     # ones row -> tcn bias + BN2
    h_cat = jnp.concatenate(cols, axis=0)                   # (kt*Cout + 1, MV)
    if not elementwise_bf16:
        h_cat = h_cat.astype(jnp.bfloat16)
    tcn = jnp.dot(wt_ref[...], h_cat, preferred_element_type=jnp.float32)  # (Cout, MV)

    # ---- residual add + final ReLU (Dropout p=0 / eval is identity) -------------------
    out = jnp.maximum(tcn + res, 0.0)
    for n in range(nb):                                     # lane-aligned per-sample store
        o_ref[n] = out[:, n * tv:(n + 1) * tv].astype(o_ref.dtype)


# ----------------------------------------------------------------------------
# Host-side wrapper: fold BN into conv params, fuse operands, build BlockSpecs.
# ----------------------------------------------------------------------------
def _bn_fold(gamma, beta, rm, rv):
    s = gamma / jnp.sqrt(rv + EPS)
    return s, beta - rm * s


def _pick_nb(n, nb_max=8):
    """Largest per-step batch pack that still leaves >= 2 grid steps (v7x: 2 TCs)."""
    best = 1
    for nb in range(1, nb_max + 1):
        if n % nb == 0 and n // nb >= 2:
            best = nb
    return best if n >= 2 else 1


def st_gcn_forward(x, A, p, kt, *, nb=None, elementwise_bf16=True,
                   out_dtype=jnp.float32):
    N, cin, T, V = x.shape
    K = A.shape[0]
    cout = p['wt'].shape[0]
    TV = T * V
    # Lane-density assumption of this layout (flagged in review): T*V fills whole vregs.
    assert TV % 128 == 0, f"T*V={TV} must be a multiple of 128 for this kernel layout"

    if nb is None:
        nb = _pick_nb(N)
    assert N % nb == 0, (N, nb)

    CG = -(-(cin + 1) // 8) * 8          # data channels + ones channel, padded to 8

    s1, t1 = _bn_fold(*p['bn1'])
    s2, t2 = _bn_fold(*p['bn2'])
    sr, tr = _bn_fold(*p['bnr'])

    # Fused channel-mix weight: rows [0,cout) = gcn (BN1 scale folded), rows [cout,2cout)
    # = residual (BNr folded). Column blocks 0..K-1 act on the aggregated x, block K on
    # raw x; column `cin` of each block is the ones channel, carrying conv biases and BN
    # shifts, so the kernel needs no bias operand or broadcast adds.
    wg3 = p['wg'].reshape(K, cout, cin)
    bg2 = p['bg'].reshape(K, cout)
    w1 = jnp.zeros((2 * cout, (K + 1) * CG), jnp.float32)
    for k in range(K):
        w1 = w1.at[:cout, k * CG:k * CG + cin].set(wg3[k] * s1[:, None])
        w1 = w1.at[:cout, k * CG + cin].set(bg2[k] * s1)     # gcn conv bias (pre-agg)
    w1 = w1.at[:cout, K * CG + cin].set(t1)                  # BN1 shift
    w1 = w1.at[cout:, K * CG:K * CG + cin].set(p['wr'] * sr[:, None])
    w1 = w1.at[cout:, K * CG + cin].set(p['br'] * sr + tr)   # residual bias + BNr shift
    w1 = w1.astype(jnp.bfloat16)

    # Temporal conv with BN2 scale folded; last column = tcn bias + BN2 shift (ones row).
    wt_cols = jnp.transpose(p['wt'] * s2[:, None, None], (0, 2, 1)).reshape(cout, kt * cout)
    wt_aug = jnp.concatenate([wt_cols, (p['bt'] * s2 + t2)[:, None]],
                             axis=1).astype(jnp.bfloat16)    # (cout, kt*cout + 1)

    # Block-diagonal adjacency kron(I_{nb*T}, A[k]), K branches lane-concatenated.
    M = nb * T
    a_bd = (jnp.eye(M, dtype=jnp.float32)[None, :, None, :, None]
            * A.astype(jnp.float32)[:, None, :, None, :]).reshape(K, M * V, M * V)
    a_cat = jnp.transpose(a_bd, (1, 0, 2)).reshape(M * V, K * M * V).astype(jnp.bfloat16)

    # NCHW -> (N, CG, T*V): append ones channel (+ zero pad channels); lane axis dense.
    x_flat = x.reshape(N, cin, TV).astype(jnp.bfloat16)
    extra = [jnp.ones((N, 1, TV), jnp.bfloat16)]
    if CG > cin + 1:
        extra.append(jnp.zeros((N, CG - cin - 1, TV), jnp.bfloat16))
    x_aug = jnp.concatenate([x_flat] + extra, axis=1)        # (N, CG, TV)

    kernel = functools.partial(st_gcn_kernel, t_len=T, v_nodes=V,
                               elementwise_bf16=elementwise_bf16)

    out_flat = pl.pallas_call(
        kernel,
        out_shape=jax.ShapeDtypeStruct((N, cout, TV), out_dtype),
        grid_spec=pltpu.PrefetchScalarGridSpec(
            num_scalar_prefetch=0,
            grid=(N // nb,),
            in_specs=[
                pl.BlockSpec((nb, CG, TV), lambda i: (i, 0, 0)),
                pl.BlockSpec((2 * cout, (K + 1) * CG), lambda i: (0, 0)),
                pl.BlockSpec((cout, kt * cout + 1), lambda i: (0, 0)),
                pl.BlockSpec((M * V, K * M * V), lambda i: (0, 0)),
            ],
            out_specs=pl.BlockSpec((nb, cout, TV), lambda i: (i, 0, 0)),
        ),
        compiler_params=pltpu.CompilerParams(
            dimension_semantics=("parallel",),
            vmem_limit_bytes=32 * 1024 * 1024,
        ),
    )(x_aug, w1, wt_aug, a_cat)

    out = out_flat.reshape(N, cout, T, V)                    # free reshape back to NCHW
    return out, A


# ----------------------------------------------------------------------------
# Deterministic parameter init (shapes follow the PyTorch module __init__).
# ----------------------------------------------------------------------------
def init_params(key, cin, cout, K, kt):
    ks = jax.random.split(key, 18)
    n = lambda k, shp, s=0.1: s * jax.random.normal(k, shp, jnp.float32)
    u = lambda k, shp: jax.random.uniform(k, shp, jnp.float32, 0.5, 1.5)
    return {
        'wg': n(ks[0], (K * cout, cin)),    # gcn.conv: Conv2d(cin, cout*K, 1)
        'bg': n(ks[1], (K * cout,)),
        'wt': n(ks[2], (cout, cout, kt)),   # tcn conv: Conv2d(cout, cout, (kt,1))
        'bt': n(ks[3], (cout,)),
        'wr': n(ks[4], (cout, cin)),        # residual: Conv2d(cin, cout, 1)
        'br': n(ks[5], (cout,)),
        # BatchNorm2d: (gamma, beta, running_mean, running_var)
        'bn1': (u(ks[6], (cout,)), n(ks[7], (cout,)), n(ks[8], (cout,)), u(ks[9], (cout,))),
        'bn2': (u(ks[10], (cout,)), n(ks[11], (cout,)), n(ks[12], (cout,)), u(ks[13], (cout,))),
        'bnr': (u(ks[14], (cout,)), n(ks[15], (cout,)), n(ks[16], (cout,)), u(ks[17], (cout,))),
    }


# ----------------------------------------------------------------------------
# Pure-JAX reference (mirrors the PyTorch forward in eval mode, f32 HIGHEST).
# ----------------------------------------------------------------------------
def reference_forward(x, A, p, kt):
    N, cin, T, V = x.shape
    K = A.shape[0]
    cout = p['wt'].shape[0]
    pad = (kt - 1) // 2

    def bn(z, bnp):
        g, b, rm, rv = (v[None, :, None, None] for v in bnp)
        return (z - rm) / jnp.sqrt(rv + EPS) * g + b

    y = jnp.einsum('oc,nctv->notv', p['wg'], x, precision=PRECISION) \
        + p['bg'][None, :, None, None]
    y = y.reshape(N, K, cout, T, V)
    g = jnp.einsum('nkctv,kvw->nctw', y, A, precision=PRECISION)

    h = jax.nn.relu(bn(g, p['bn1']))
    hp = jnp.pad(h, ((0, 0), (0, 0), (pad, pad), (0, 0)))
    conv = jnp.zeros((N, cout, T, V), jnp.float32)
    for dt in range(kt):
        conv = conv + jnp.einsum('oi,nitv->notv', p['wt'][:, :, dt],
                                 hp[:, :, dt:dt + T, :], precision=PRECISION)
    conv = conv + p['bt'][None, :, None, None]
    tcn = bn(conv, p['bn2'])

    res = jnp.einsum('oi,nitv->notv', p['wr'], x, precision=PRECISION) \
        + p['br'][None, :, None, None]
    res = bn(res, p['bnr'])
    return jax.nn.relu(tcn + res), A


if __name__ == "__main__":
    # st_gcn(in_channels=4, out_channels=8, kernel_size=(3, 2), stride=1,
    #        dropout=0, residual=True)  -> residual branch is conv + BN (cin != cout)
    N, Cin, Cout, T, V = 4, 4, 8, 8, 16          # T*V = 128 lanes; Nb=2 -> grid=(2,)
    kt, K = 3, 2

    key = jax.random.PRNGKey(0)
    kx, ka, kp = jax.random.split(key, 3)
    x = jax.random.normal(kx, (N, Cin, T, V), jnp.float32)      # (N, C, T, V)
    A = jax.random.uniform(ka, (K, V, V), jnp.float32)          # (K, V, V)
    params = init_params(kp, Cin, Cout, K, kt)

    # bf16 elementwise roll/mask path only on chips with a bf16 VPU (v6e/v7x);
    # keep f32 on v5e and older (per review), correctness is identical either way.
    kind = jax.devices()[0].device_kind.lower()
    ew_bf16 = ('v6' in kind) or ('v7' in kind)

    out, A_out = st_gcn_forward(x, A, params, kt, elementwise_bf16=ew_bf16)
    out = jax.block_until_ready(out)

    ref, _ = reference_forward(x, A, params, kt)
    assert out.shape == (N, Cout, T, V), out.shape
    assert A_out.shape == (K, V, V)
    # Kernel feeds bf16 to the MXU (f32 accumulation); compare against the f32
    # reference with a correspondingly relaxed tolerance.
    max_err = float(jnp.max(jnp.abs(out - ref)))
    assert jnp.allclose(out, ref, atol=5e-2, rtol=5e-2), f"max_err={max_err}"

    print("KERNEL_OK")
</pallas_src>

<mosaic_0001>
module attributes {stable_mosaic.version = 11 : i64} {
  func.func @st_gcn_kernel(%arg0: i32, %arg1: memref<2x8x128xbf16, #tpu.memory_space<vmem>>, %arg2: memref<16x24xbf16, #tpu.memory_space<vmem>>, %arg3: memref<8x25xbf16, #tpu.memory_space<vmem>>, %arg4: memref<256x512xbf16, #tpu.memory_space<vmem>>, %arg5: memref<2x8x128xf32, #tpu.memory_space<vmem>>) attributes {dimension_semantics = [#tpu.dimension_semantics<parallel>], iteration_bounds = array<i64: 2>, scalar_prefetch = 0 : i64, scratch_operands = 0 : i64, tpu.core_type = #tpu.core_type<tc>, window_params = [{transform_indices = @transform_0, window_bounds = array<i64: 2, 8, 128>}, {pipeline_mode = #tpu.pipeline_mode<synchronous>, transform_indices = @transform_1, window_bounds = array<i64: 16, 24>}, {pipeline_mode = #tpu.pipeline_mode<synchronous>, transform_indices = @transform_2, window_bounds = array<i64: 8, 25>}, {pipeline_mode = #tpu.pipeline_mode<synchronous>, transform_indices = @transform_3, window_bounds = array<i64: 256, 512>}, {transform_indices = @transform_4, window_bounds = array<i64: 2, 8, 128>}]} {
    %c0 = arith.constant 0 : index
    %c0_0 = arith.constant 0 : index
    %c0_1 = arith.constant 0 : index
    %0 = vector.load %arg1[%c0, %c0_0, %c0_1] : memref<2x8x128xbf16, #tpu.memory_space<vmem>>, vector<1x8x128xbf16>
    %1 = vector.shape_cast %0 : vector<1x8x128xbf16> to vector<8x128xbf16>
    %c1 = arith.constant 1 : index
    %c0_2 = arith.constant 0 : index
    %c0_3 = arith.constant 0 : index
    %2 = vector.load %arg1[%c1, %c0_2, %c0_3] : memref<2x8x128xbf16, #tpu.memory_space<vmem>>, vector<1x8x128xbf16>
    %3 = vector.shape_cast %2 : vector<1x8x128xbf16> to vector<8x128xbf16>
    %4 = tpu.concatenate %1, %3 in 1 : vector<8x128xbf16>, vector<8x128xbf16> -> vector<8x256xbf16>
    %c0_4 = arith.constant 0 : index
    %c0_5 = arith.constant 0 : index
    %5 = vector.load %arg4[%c0_4, %c0_5] : memref<256x512xbf16, #tpu.memory_space<vmem>>, vector<256x512xbf16>
    %cst = arith.constant dense<0.000000e+00> : vector<8x512xf32>
    %6 = tpu.matmul %4, %5, %cst {dimension_numbers = #tpu.dot_dimension_numbers<[1], [0], [0], [1], [0, 0, 1, 1], [], []>} : vector<8x256xbf16>, vector<256x512xbf16>, vector<8x512xf32> -> vector<8x512xf32>
    %7 = vector.extract_strided_slice %6 {offsets = [0, 0], sizes = [8, 256], strides = [1, 1]} : vector<8x512xf32> to vector<8x256xf32>
    %8 = arith.truncf %7 : vector<8x256xf32> to vector<8x256xbf16>
    %9 = vector.extract_strided_slice %6 {offsets = [0, 256], sizes = [8, 256], strides = [1, 1]} : vector<8x512xf32> to vector<8x256xf32>
    %10 = arith.truncf %9 : vector<8x256xf32> to vector<8x256xbf16>
    %11 = tpu.concatenate %8, %10, %4 in 0 : vector<8x256xbf16>, vector<8x256xbf16>, vector<8x256xbf16> -> vector<24x256xbf16>
    %c0_6 = arith.constant 0 : index
    %c0_7 = arith.constant 0 : index
    %12 = vector.load %arg2[%c0_6, %c0_7] : memref<16x24xbf16, #tpu.memory_space<vmem>>, vector<16x24xbf16>
    %cst_8 = arith.constant dense<0.000000e+00> : vector<16x256xf32>
    %13 = tpu.matmul %12, %11, %cst_8 {dimension_numbers = #tpu.dot_dimension_numbers<[1], [0], [0], [1], [0, 0, 1, 1], [], []>} : vector<16x24xbf16>, vector<24x256xbf16>, vector<16x256xf32> -> vector<16x256xf32>
    %14 = vector.extract_strided_slice %13 {offsets = [8, 0], sizes = [8, 256], strides = [1, 1]} : vector<16x256xf32> to vector<8x256xf32>
    %15 = vector.extract_strided_slice %13 {offsets = [0, 0], sizes = [8, 256], strides = [1, 1]} : vector<16x256xf32> to vector<8x256xf32>
    %cst_9 = arith.constant 0.000000e+00 : f32
    %16 = vector.broadcast %cst_9 : f32 to vector<8x256xf32>
    %17 = arith.maximumf %15, %16 : vector<8x256xf32>
    %18 = tpu.iota {dimensions = array<i32: 1>} : vector<8x256xi32>
    %c128_i32 = arith.constant 128 : i32
    %c0_i32 = arith.constant 0 : i32
    %19 = arith.cmpi eq, %c128_i32, %c0_i32 : i32
    %c1_i32 = arith.constant 1 : i32
    %20 = arith.select %19, %c1_i32, %c128_i32 : i32
    %21 = vector.broadcast %20 : i32 to vector<8x256xi32>
    %22 = arith.remsi %18, %21 : vector<8x256xi32>
    %c0_i32_10 = arith.constant 0 : i32
    %23 = vector.broadcast %c0_i32_10 : i32 to vector<8x256xi32>
    %24 = arith.cmpi ne, %22, %23 : vector<8x256xi32>
    %c0_i32_11 = arith.constant 0 : i32
    %25 = vector.broadcast %c0_i32_11 : i32 to vector<8x256xi32>
    %26 = arith.cmpi slt, %22, %25 : vector<8x256xi32>
    %c0_i32_12 = arith.constant 0 : i32
    %27 = arith.cmpi slt, %20, %c0_i32_12 : i32
    %28 = vector.broadcast %27 : i1 to vector<8x256xi1>
    %29 = vector.broadcast %28 : vector<8x256xi1> to vector<8x256xi1>
    %30 = arith.xori %26, %29 : vector<8x256xi1>
    %31 = arith.andi %30, %24 : vector<8x256xi1>
    %32 = vector.broadcast %20 : i32 to vector<8x256xi32>
    %33 = arith.addi %22, %32 : vector<8x256xi32>
    %34 = arith.select %31, %33, %22 : vector<8x256xi1>, vector<8x256xi32>
    %c16_i32 = arith.constant 16 : i32
    %35 = tpu.dynamic_rotate %17 by %c16_i32 dim 1 : vector<8x256xf32>, i32 -> vector<8x256xf32>
    %c16_i32_13 = arith.constant 16 : i32
    %36 = vector.broadcast %c16_i32_13 : i32 to vector<8x256xi32>
    %37 = arith.cmpi sge, %34, %36 : vector<8x256xi32>
    %cst_14 = arith.constant 0.000000e+00 : f32
    %38 = vector.broadcast %cst_14 : f32 to vector<8x256xf32>
    %39 = arith.select %37, %35, %38 : vector<8x256xi1>, vector<8x256xf32>
    %c240_i32 = arith.constant 240 : i32
    %40 = tpu.dynamic_rotate %17 by %c240_i32 dim 1 : vector<8x256xf32>, i32 -> vector<8x256xf32>
    %c112_i32 = arith.constant 112 : i32
    %41 = vector.broadcast %c112_i32 : i32 to vector<8x256xi32>
    %42 = arith.cmpi slt, %34, %41 : vector<8x256xi32>
    %cst_15 = arith.constant 0.000000e+00 : f32
    %43 = vector.broadcast %cst_15 : f32 to vector<8x256xf32>
    %44 = arith.select %42, %40, %43 : vector<8x256xi1>, vector<8x256xf32>
    %cst_16 = arith.constant 1.000000e+00 : f32
    %45 = vector.broadcast %cst_16 : f32 to vector<1x256xf32>
    %46 = tpu.concatenate %39, %17, %44, %45 in 0 : vector<8x256xf32>, vector<8x256xf32>, vector<8x256xf32>, vector<1x256xf32> -> vector<25x256xf32>
    %47 = arith.truncf %46 : vector<25x256xf32> to vector<25x256xbf16>
    %c0_17 = arith.constant 0 : index
    %c0_18 = arith.constant 0 : index
    %48 = vector.load %arg3[%c0_17, %c0_18] : memref<8x25xbf16, #tpu.memory_space<vmem>>, vector<8x25xbf16>
    %cst_19 = arith.constant dense<0.000000e+00> : vector<8x256xf32>
    %49 = tpu.matmul %48, %47, %cst_19 {dimension_numbers = #tpu.dot_dimension_numbers<[1], [0], [0], [1], [0, 0, 1, 1], [], []>} : vector<8x25xbf16>, vector<25x256xbf16>, vector<8x256xf32> -> vector<8x256xf32>
    %50 = arith.addf %49, %14 : vector<8x256xf32>
    %cst_20 = arith.constant 0.000000e+00 : f32
    %51 = vector.broadcast %cst_20 : f32 to vector<8x256xf32>
    %52 = arith.maximumf %50, %51 : vector<8x256xf32>
    %53 = vector.extract_strided_slice %52 {offsets = [0, 0], sizes = [8, 128], strides = [1, 1]} : vector<8x256xf32> to vector<8x128xf32>
    %c0_21 = arith.constant 0 : index
    %c0_22 = arith.constant 0 : index
    %c0_23 = arith.constant 0 : index
    %54 = vector.load %arg5[%c0_21, %c0_22, %c0_23] : memref<2x8x128xf32, #tpu.memory_space<vmem>>, vector<1x8x128xf32>
    %55 = vector.shape_cast %54 : vector<1x8x128xf32> to vector<8x128xf32>
    %56 = vector.shape_cast %53 : vector<8x128xf32> to vector<1x8x128xf32>
    tpu.vector_store %arg5[%c0_21, %c0_22, %c0_23], %56 {strides = array<i32>} : memref<2x8x128xf32, #tpu.memory_space<vmem>>, vector<1x8x128xf32>,
    %57 = vector.extract_strided_slice %52 {offsets = [0, 128], sizes = [8, 128], strides = [1, 1]} : vector<8x256xf32> to vector<8x128xf32>
    %c1_24 = arith.constant 1 : index
    %c0_25 = arith.constant 0 : index
    %c0_26 = arith.constant 0 : index
    %58 = vector.load %arg5[%c1_24, %c0_25, %c0_26] : memref<2x8x128xf32, #tpu.memory_space<vmem>>, vector<1x8x128xf32>
    %59 = vector.shape_cast %58 : vector<1x8x128xf32> to vector<8x128xf32>
    %60 = vector.shape_cast %57 : vector<8x128xf32> to vector<1x8x128xf32>
    tpu.vector_store %arg5[%c1_24, %c0_25, %c0_26], %60 {strides = array<i32>} : memref<2x8x128xf32, #tpu.memory_space<vmem>>, vector<1x8x128xf32>,
    return
  }
  func.func @transform_0(%arg0: i32) -> (i32, i32, i32) {
    %c0_i32 = arith.constant 0 : i32
    %c0_i32_0 = arith.constant 0 : i32
    %c0_i32_1 = arith.constant 0 : i32
    return %arg0, %c0_i32, %c0_i32_0 : i32, i32, i32
  }
  func.func @transform_1(%arg0: i32) -> (i32, i32) {
    %c0_i32 = arith.constant 0 : i32
    %c0_i32_0 = arith.constant 0 : i32
    %c0_i32_1 = arith.constant 0 : i32
    return %c0_i32, %c0_i32_0 : i32, i32
  }
  func.func @transform_2(%arg0: i32) -> (i32, i32) {
    %c0_i32 = arith.constant 0 : i32
    %c0_i32_0 = arith.constant 0 : i32
    %c0_i32_1 = arith.constant 0 : i32
    return %c0_i32, %c0_i32_0 : i32, i32
  }
  func.func @transform_3(%arg0: i32) -> (i32, i32) {
    %c0_i32 = arith.constant 0 : i32
    %c0_i32_0 = arith.constant 0 : i32
    %c0_i32_1 = arith.constant 0 : i32
    return %c0_i32, %c0_i32_0 : i32, i32
  }
  func.func @transform_4(%arg0: i32) -> (i32, i32, i32) {
    %c0_i32 = arith.constant 0 : i32
    %c0_i32_0 = arith.constant 0 : i32
    %c0_i32_1 = arith.constant 0 : i32
    return %arg0, %c0_i32, %c0_i32_0 : i32, i32, i32
  }
}

</mosaic_0001>

<llo_original>
// kernel: tpu_custom_call.1
$region0: #{tpu_custom_call.1}
  #allocation0 [shape = 'u32[]', space=smem, size = 0x4, offset = 0x4, fixed_abs, tag = 'smem constant byte address 0x4 - core index']
  #allocation1 [shape = 'u32[144,128]{1,0:T(1,128)}', space=vmem, size = 0x12000, scoped, tag = 'internal scratch']
  %s0 = inlined_call_operand.hbm [shape: bf16[4,8,128], index: 0, kind: input, shape index: {}]
  %s1 = inlined_call_operand.hbm [shape: bf16[16,24], index: 1, kind: input, shape index: {}]
  %s2 = inlined_call_operand.vmem [shape: bf16[8,25], index: 2, kind: input, shape index: {}]
  %s3 = inlined_call_operand.hbm [shape: bf16[256,512], index: 3, kind: input, shape index: {}]
  %s4 = inlined_call_operand.hbm [shape: f32[4,8,128], index: 4, kind: output, shape index: {}]
  %s5 = sld [smem:[#allocation0]]
  $region61: #{tpu_custom_call.1} parent=0
    _
  %s7 = ssub.s32 1, %s5
  %s8 = scalar_select 0, %s7, %s5
  $region1: #{tpu_custom_call.1} parent=0
    #allocation2 [shape = 'u8[8192]{0}', space=vmem, size = 0x2000, scoped, tag = 'input window, operand 0']
    #allocation3 [shape = 's32[2]{0}', space=sflag, size = 0x8, scoped, tag = 'scoped memory for tpu_custom_call.1']
    #allocation4 [shape = 's32[2]{0}', space=sflag, size = 0x8, scoped, tag = 'scoped memory for tpu_custom_call.1']
    #allocation5 [shape = 'u8[4096]{0}', space=vmem, size = 0x1000, scoped, tag = 'input window, operand 1, single buffered']
    #allocation6 [shape = 's32[1]{0}', space=sflag, size = 0x4, scoped, tag = 'scoped memory for tpu_custom_call.1']
    #allocation7 [shape = 'u8[262144]{0}', space=vmem, size = 0x40000, scoped, tag = 'input window, operand 3, single buffered']
    #allocation8 [shape = 'u8[16384]{0}', space=vmem, size = 0x4000, scoped, tag = 'output window, operand 0']
    %9 = vsyncpa [#allocation3], 0
    %s10 = scalar_lea.sflag [#allocation3], 1
    %11 = vsyncpa %s10, 0
    %12 = vsyncpa [#allocation6], 0
    %13 = vsyncpa [#allocation4], 0
    %s14 = scalar_lea.sflag [#allocation4], 1
    %15 = vsyncpa %s14, 0
    loop: start=0, step=1, limit=4
    $region2: #{tpu_custom_call.1} parent=1 // loop_pre_header
      _
    $region3: #{tpu_custom_call.1} parent=1 // loop_header
      %s17 = sphi 0, %s21
      %p18 = scmp.ge.s32.totalorder %s17, 4
      %s27 = sphi 0, %s29
      %s30 = sphi 0, %s27
      %s31 = sphi 0, %s30
      %s47 = sphi 0, %s31
      %s51 = sphi 0, %s51
      %s53 = sphi 0, %s51
      %s54 = sphi 0, %s53
      %s68 = sphi 0, %s54
      %s72 = sphi 0, %s72
      %s74 = sphi 0, %s72
      %s75 = sphi 0, %s74
      %s89 = sphi 0, %s75
      %s93 = sphi 0, %s93
      %s95 = sphi 0, %s93
      %s96 = sphi 0, %s95
      %s110 = sphi 0, %s96
      %s116 = sphi 0, %s118
      %s119 = sphi 0, %s116
      %s120 = sphi 0, %s119
      %s136 = sphi 0, %s120
    $region4: #{tpu_custom_call.1} parent=1 // loop_header_branch
      %20 = sbr.rel (%p18) target = $region8
    $region5: #{tpu_custom_call.1} parent=1 // loop_body
      %s22 = ssub.s32 %s17, 1
      %s23 = ssub.s32 %s17, 2
      %s24 = sadd.s32 %s17, 1
      %s25 = ssub.s32 %s17, %s24
      %p26 = scmp.eq.s32.totalorder %s25, 0
      %s28 = sadd.s32 %s27, 1
      %s29 = scalar_select %p26, %s27, %s28
      %p32 = pneg %p26
      %p33 = scmp.eq.s32.totalorder %s17, 1
      %p34 = por %p32, %p33
      %p35 = scmp.ne.s32.totalorder %s27, %s30
      %p36 = scmp.eq.s32.totalorder %s17, 0
      %p37 = por %p35, %p36
      %p38 = scmp.ne.s32.totalorder %s27, %s30
      %p39 = scmp.eq.s32.totalorder %s22, 1
      %p40 = por %p38, %p39
      %p41 = scmp.ne.s32.totalorder %s30, %s31
      %p42 = scmp.eq.s32.totalorder %s22, 0
      %p43 = por %p41, %p42
      %p44 = scmp.ne.s32.totalorder %s30, %s31
      %p45 = scmp.eq.s32.totalorder %s23, 1
      %p46 = por %p44, %p45
      %p48 = scmp.ne.s32.totalorder %s31, %s47
      %p49 = scmp.eq.s32.totalorder %s23, 0
      %p50 = por %p48, %p49
      %s52 = sadd.s32 %s51, 1
      %p55 = scmp.eq.s32.totalorder %s17, 1
      %p56 = scmp.ne.s32.totalorder %s51, %s53
      %p57 = scmp.eq.s32.totalorder %s17, 0
      %p58 = por %p56, %p57
      %p59 = scmp.ne.s32.totalorder %s51, %s53
      %p60 = scmp.eq.s32.totalorder %s22, 1
      %p61 = por %p59, %p60
      %p62 = scmp.ne.s32.totalorder %s53, %s54
      %p63 = scmp.eq.s32.totalorder %s22, 0
      %p64 = por %p62, %p63
      %p65 = scmp.ne.s32.totalorder %s53, %s54
      %p66 = scmp.eq.s32.totalorder %s23, 1
      %p67 = por %p65, %p66
      %p69 = scmp.ne.s32.totalorder %s54, %s68
      %p70 = scmp.eq.s32.totalorder %s23, 0
      %p71 = por %p69, %p70
      %s73 = sadd.s32 %s72, 1
      %p76 = scmp.eq.s32.totalorder %s17, 1
      %p77 = scmp.ne.s32.totalorder %s72, %s74
      %p78 = scmp.eq.s32.totalorder %s17, 0
      %p79 = por %p77, %p78
      %p80 = scmp.ne.s32.totalorder %s72, %s74
      %p81 = scmp.eq.s32.totalorder %s22, 1
      %p82 = por %p80, %p81
      %p83 = scmp.ne.s32.totalorder %s74, %s75
      %p84 = scmp.eq.s32.totalorder %s22, 0
      %p85 = por %p83, %p84
      %p86 = scmp.ne.s32.totalorder %s74, %s75
      %p87 = scmp.eq.s32.totalorder %s23, 1
      %p88 = por %p86, %p87
      %p90 = scmp.ne.s32.totalorder %s75, %s89
      %p91 = scmp.eq.s32.totalorder %s23, 0
      %p92 = por %p90, %p91
      %s94 = sadd.s32 %s93, 1
      %p97 = scmp.eq.s32.totalorder %s17, 1
      %p98 = scmp.ne.s32.totalorder %s93, %s95
      %p99 = scmp.eq.s32.totalorder %s17, 0
      %p100 = por %p98, %p99
      %p101 = scmp.ne.s32.totalorder %s93, %s95
      %p102 = scmp.eq.s32.totalorder %s22, 1
      %p103 = por %p101, %p102
      %p104 = scmp.ne.s32.totalorder %s95, %s96
      %p105 = scmp.eq.s32.totalorder %s22, 0
      %p106 = por %p104, %p105
      %p107 = scmp.ne.s32.totalorder %s95, %s96
      %p108 = scmp.eq.s32.totalorder %s23, 1
      %p109 = por %p107, %p108
      %p111 = scmp.ne.s32.totalorder %s96, %s110
      %p112 = scmp.eq.s32.totalorder %s23, 0
      %p113 = por %p111, %p112
      %s114 = ssub.s32 %s17, %s24
      %p115 = scmp.eq.s32.totalorder %s114, 0
      %s117 = sadd.s32 %s116, 1
      %s118 = scalar_select %p115, %s116, %s117
      %p121 = pneg %p115
      %p122 = scmp.eq.s32.totalorder %s17, 1
      %p123 = por %p121, %p122
      %p124 = scmp.ne.s32.totalorder %s116, %s119
      %p125 = scmp.eq.s32.totalorder %s17, 0
      %p126 = por %p124, %p125
      %p127 = scmp.ne.s32.totalorder %s116, %s119
      %p128 = scmp.eq.s32.totalorder %s22, 1
      %p129 = por %p127, %p128
      %p130 = scmp.ne.s32.totalorder %s119, %s120
      %p131 = scmp.eq.s32.totalorder %s22, 0
      %p132 = por %p130, %p131
      %p133 = scmp.ne.s32.totalorder %s119, %s120
      %p134 = scmp.eq.s32.totalorder %s23, 1
      %p135 = por %p133, %p134
      %p137 = scmp.ne.s32.totalorder %s120, %s136
      %p138 = scmp.eq.s32.totalorder %s23, 0
      %p139 = por %p137, %p138
      %p140 = scmp.le.s32.totalorder 1, %s17
      %p141 = scmp.lt.s32.totalorder %s17, 3
      %p142 = pnand %p140, %p141
      %p143 = pneg %p142
      // Predicated region
      $region9: #{tpu_custom_call.1} parent=5 // pred_check
        _
      $region10: #{tpu_custom_call.1} parent=5 // pred_check_branch
        %145 = sbr.rel (%p142) target = $region12
      $region11: #{tpu_custom_call.1} parent=5 // pred_region
        %s146 = ssub.s32 %s17, 1
        // Predicated region
        $region13: #{tpu_custom_call.1} parent=11 // pred_check
          %p147 = pneg %p64
        $region14: #{tpu_custom_call.1} parent=11 // pred_check_branch
          %149 = sbr.rel (%p147) target = $region16
        $region15: #{tpu_custom_call.1} parent=11 // pred_region
          %s151 = ssub.s32 128, 128
          %152 = vsyncadd [#allocation6], %s151
          %s153 = sshll.u32 [#allocation5], 4
          %s154 = int_to_ptr.vmem [resolvable:$true] %s153
          %159 = dma.hbm_to_vmem [thread:$0]  %s1, 128, %s154, [#allocation6], 64, 64, 4
        $region16: #{tpu_custom_call.1} parent=11 // pred_fallthru
          _
        // Predicated region
        $region17: #{tpu_custom_call.1} parent=11 // pred_check
          %p160 = pneg %p85
        $region18: #{tpu_custom_call.1} parent=11 // pred_check_branch
          %162 = sbr.rel (%p160) target = $region20
        $region19: #{tpu_custom_call.1} parent=11 // pred_region
          _
        $region20: #{tpu_custom_call.1} parent=11 // pred_fallthru
          _
        // Predicated region
        $region21: #{tpu_custom_call.1} parent=11 // pred_check
          %p163 = pneg %p106
        $region22: #{tpu_custom_call.1} parent=11 // pred_check_branch
          %165 = sbr.rel (%p163) target = $region24
        $region23: #{tpu_custom_call.1} parent=11 // pred_region
          %s167 = ssub.s32 8192, 8192
          %168 = vsyncadd [#allocation6], %s167
          %s169 = sshll.u32 [#allocation7], 4
          %s170 = int_to_ptr.vmem [resolvable:$true] %s169
          %175 = dma.hbm_to_vmem [thread:$0]  %s3, 8192, %s170, [#allocation6], 256, 256, 16
        $region24: #{tpu_custom_call.1} parent=11 // pred_fallthru
          _
      $region12: #{tpu_custom_call.1} parent=5 // pred_fallthru
        _
      %p176 = scmp.lt.s32.totalorder %s17, 2
      // Predicated region
      $region25: #{tpu_custom_call.1} parent=5 // pred_check
        %p177 = pneg %p176
      $region26: #{tpu_custom_call.1} parent=5 // pred_check_branch
        %179 = sbr.rel (%p177) target = $region28
      $region27: #{tpu_custom_call.1} parent=5 // pred_region
        // Predicated region
        $region29: #{tpu_custom_call.1} parent=27 // pred_check
          %p180 = pneg %p37
        $region30: #{tpu_custom_call.1} parent=27 // pred_check_branch
          %182 = sbr.rel (%p180) target = $region32
        $region31: #{tpu_custom_call.1} parent=27 // pred_region
          %s183 = sand.u32 %s27, 1
          %s184 = scalar_lea.sflag [#allocation3], %s183
          %s185 = sand.u32 %s27, 1
          %s186 = smul.addr %s185, 8
          %s187 = scalar_lea.vmem [#allocation2], %s186
          %s188 = smul.u32 2, %s17
          %s190 = ssub.s32 128, 128
          %191 = vsyncadd %s184, %s190
          %s192 = smul.addr %s188, 64
          %s193 = scalar_lea.hbm %s0, %s192
          %s194 = sshll.u32 %s187, 4
          %s195 = int_to_ptr.vmem [resolvable:$true] %s194
          %200 = dma.hbm_to_vmem [thread:$0]  %s193, 128, %s195, %s184, 64, 64, 4
        $region32: #{tpu_custom_call.1} parent=27 // pred_fallthru
          _
      $region28: #{tpu_custom_call.1} parent=5 // pred_fallthru
        _
      %p201 = scmp.le.s32.totalorder 1, %s17
      %p202 = scmp.lt.s32.totalorder %s17, 3
      %p203 = pnand %p201, %p202
      %p204 = pneg %p203
      // Predicated region
      $region33: #{tpu_custom_call.1} parent=5 // pred_check
        _
      $region34: #{tpu_custom_call.1} parent=5 // pred_check_branch
        %206 = sbr.rel (%p203) target = $region36
      $region35: #{tpu_custom_call.1} parent=5 // pred_region
        %s207 = ssub.s32 %s17, 1
        %s208 = sand.u32 %s30, 1
        %s209 = scalar_lea.sflag [#allocation3], %s208
        %s210 = sand.u32 %s30, 1
        %s211 = smul.addr %s210, 8
        %s212 = scalar_lea.vmem [#allocation2], %s211
        // Predicated region
        $region37: #{tpu_custom_call.1} parent=35 // pred_check
          %p213 = pneg %p43
        $region38: #{tpu_custom_call.1} parent=35 // pred_check_branch
          %215 = sbr.rel (%p213) target = $region40
        $region39: #{tpu_custom_call.1} parent=35 // pred_region
          %216 = dma.done %s209, 128
        $region40: #{tpu_custom_call.1} parent=35 // pred_fallthru
          _
        // Predicated region
        $region41: #{tpu_custom_call.1} parent=35 // pred_check
          %p217 = pneg %p64
        $region42: #{tpu_custom_call.1} parent=35 // pred_check_branch
          %219 = sbr.rel (%p217) target = $region44
        $region43: #{tpu_custom_call.1} parent=35 // pred_region
          %220 = dma.done [#allocation6], 128
        $region44: #{tpu_custom_call.1} parent=35 // pred_fallthru
          _
        // Predicated region
        $region45: #{tpu_custom_call.1} parent=35 // pred_check
          %p221 = pneg %p106
        $region46: #{tpu_custom_call.1} parent=35 // pred_check_branch
          %223 = sbr.rel (%p221) target = $region48
        $region47: #{tpu_custom_call.1} parent=35 // pred_region
          %224 = dma.done [#allocation6], 8192
        $region48: #{tpu_custom_call.1} parent=35 // pred_fallthru
          _
        %s225 = sand.u32 %s30, 1
        %s226 = scalar_lea.sflag [#allocation3], %s225
        %s227 = sand.u32 %s30, 1
        %s228 = smul.addr %s227, 8
        %s229 = scalar_lea.vmem [#allocation2], %s228
        %p230 = pneg %p43
        %p231 = pneg %p40
        %p232 = pneg %p64
        %p233 = pneg %p61
        %p234 = pneg %p85
        %p235 = pneg %p82
        %p236 = pneg %p106
        %p237 = pneg %p103
        %p238 = pneg %p132
        %p239 = pneg %p129
        %s240 = sand.u32 %s119, 1
        %s241 = scalar_lea.sflag [#allocation4], %s240
        %s242 = sand.u32 %s119, 1
        %s243 = smul.addr %s242, 16
        %s244 = scalar_lea.vmem [#allocation8], %s243
        %s245 = smul.u32 2, %s22
        %s246 = smul.u32 2, %s22
        %v248 = vld [vmem:[%s212] sm:$0xf]
        %s249 = scalar_lea.vmem %s212, 4 [#allocation2]
        %v250 = vld [vmem:[%s249] sm:$0xf]
        %v251 = vld [vmem:[#allocation7] sm:$0xff]
        %v252 = vld [vmem:[#allocation7 + $0x8] sm:$0xff]
        %v253 = vld [vmem:[#allocation7 + $0x10] sm:$0xff]
        %v254 = vld [vmem:[#allocation7 + $0x18] sm:$0xff]
        %v255 = vld [vmem:[#allocation7 + $0x20] sm:$0xff]
        %v256 = vld [vmem:[#allocation7 + $0x28] sm:$0xff]
        %v257 = vld [vmem:[#allocation7 + $0x30] sm:$0xff]
        %v258 = vld [vmem:[#allocation7 + $0x38] sm:$0xff]
        %v259 = vld [vmem:[#allocation7 + $0x40] sm:$0xff]
        %v260 = vld [vmem:[#allocation7 + $0x48] sm:$0xff]
        %v261 = vld [vmem:[#allocation7 + $0x50] sm:$0xff]
        %v262 = vld [vmem:[#allocation7 + $0x58] sm:$0xff]
        %v263 = vld [vmem:[#allocation7 + $0x60] sm:$0xff]
        %v264 = vld [vmem:[#allocation7 + $0x68] sm:$0xff]
        %v265 = vld [vmem:[#allocation7 + $0x70] sm:$0xff]
        %v266 = vld [vmem:[#allocation7 + $0x78] sm:$0xff]
        %v267 = vld [vmem:[#allocation7 + $0x80] sm:$0xff]
        %v268 = vld [vmem:[#allocation7 + $0x88] sm:$0xff]
        %v269 = vld [vmem:[#allocation7 + $0x90] sm:$0xff]
        %v270 = vld [vmem:[#allocation7 + $0x98] sm:$0xff]
        %v271 = vld [vmem:[#allocation7 + $0xa0] sm:$0xff]
        %v272 = vld [vmem:[#allocation7 + $0xa8] sm:$0xff]
        %v273 = vld [vmem:[#allocation7 + $0xb0] sm:$0xff]
        %v274 = vld [vmem:[#allocation7 + $0xb8] sm:$0xff]
        %v275 = vld [vmem:[#allocation7 + $0xc0] sm:$0xff]
        %v276 = vld [vmem:[#allocation7 + $0xc8] sm:$0xff]
        %v277 = vld [vmem:[#allocation7 + $0xd0] sm:$0xff]
        %v278 = vld [vmem:[#allocation7 + $0xd8] sm:$0xff]
        %v279 = vld [vmem:[#allocation7 + $0xe0] sm:$0xff]
        %v280 = vld [vmem:[#allocation7 + $0xe8] sm:$0xff]
        %v281 = vld [vmem:[#allocation7 + $0xf0] sm:$0xff]
        %v282 = vld [vmem:[#allocation7 + $0xf8] sm:$0xff]
        %v283 = vld [vmem:[#allocation7 + $0x100] sm:$0xff]
        %v284 = vld [vmem:[#allocation7 + $0x108] sm:$0xff]
        %v285 = vld [vmem:[#allocation7 + $0x110] sm:$0xff]
        %v286 = vld [vmem:[#allocation7 + $0x118] sm:$0xff]
        %v287 = vld [vmem:[#allocation7 + $0x120] sm:$0xff]
        %v288 = vld [vmem:[#allocation7 + $0x128] sm:$0xff]
        %v289 = vld [vmem:[#allocation7 + $0x130] sm:$0xff]
        %v290 = vld [vmem:[#allocation7 + $0x138] sm:$0xff]
        %v291 = vld [vmem:[#allocation7 + $0x140] sm:$0xff]
        %v292 = vld [vmem:[#allocation7 + $0x148] sm:$0xff]
        %v293 = vld [vmem:[#allocation7 + $0x150] sm:$0xff]
        %v294 = vld [vmem:[#allocation7 + $0x158] sm:$0xff]
        %v295 = vld [vmem:[#allocation7 + $0x160] sm:$0xff]
        %v296 = vld [vmem:[#allocation7 + $0x168] sm:$0xff]
        %v297 = vld [vmem:[#allocation7 + $0x170] sm:$0xff]
        %v298 = vld [vmem:[#allocation7 + $0x178] sm:$0xff]
        %v299 = vld [vmem:[#allocation7 + $0x180] sm:$0xff]
        %v300 = vld [vmem:[#allocation7 + $0x188] sm:$0xff]
        %v301 = vld [vmem:[#allocation7 + $0x190] sm:$0xff]
        %v302 = vld [vmem:[#allocation7 + $0x198] sm:$0xff]
        %v303 = vld [vmem:[#allocation7 + $0x1a0] sm:$0xff]
        %v304 = vld [vmem:[#allocation7 + $0x1a8] sm:$0xff]
        %v305 = vld [vmem:[#allocation7 + $0x1b0] sm:$0xff]
        %v306 = vld [vmem:[#allocation7 + $0x1b8] sm:$0xff]
        %v307 = vld [vmem:[#allocation7 + $0x1c0] sm:$0xff]
        %v308 = vld [vmem:[#allocation7 + $0x1c8] sm:$0xff]
        %v309 = vld [vmem:[#allocation7 + $0x1d0] sm:$0xff]
        %v310 = vld [vmem:[#allocation7 + $0x1d8] sm:$0xff]
        %v311 = vld [vmem:[#allocation7 + $0x1e0] sm:$0xff]
        %v312 = vld [vmem:[#allocation7 + $0x1e8] sm:$0xff]
        %v313 = vld [vmem:[#allocation7 + $0x1f0] sm:$0xff]
        %v314 = vld [vmem:[#allocation7 + $0x1f8] sm:$0xff]
        %v379 = vunpack.c.l.b16 %v251
        %v380 = vunpack.c.h.b16 %v251
        %v381 = vunpack.c.l.b16 %v252
        %v382 = vunpack.c.h.b16 %v252
        %v383 = vunpack.c.l.b16 %v253
        %v384 = vunpack.c.h.b16 %v253
        %v385 = vunpack.c.l.b16 %v254
        %v386 = vunpack.c.h.b16 %v254
        %v387 = vunpack.c.l.b16 %v255
        %v388 = vunpack.c.h.b16 %v255
        %v389 = vunpack.c.l.b16 %v256
        %v390 = vunpack.c.h.b16 %v256
        %v391 = vunpack.c.l.b16 %v257
        %v392 = vunpack.c.h.b16 %v257
        %v393 = vunpack.c.l.b16 %v258
        %v394 = vunpack.c.h.b16 %v258
        %v395 = vunpack.c.l.b16 %v259
        %v396 = vunpack.c.h.b16 %v259
        %v397 = vunpack.c.l.b16 %v260
        %v398 = vunpack.c.h.b16 %v260
        %v399 = vunpack.c.l.b16 %v261
        %v400 = vunpack.c.h.b16 %v261
        %v401 = vunpack.c.l.b16 %v262
        %v402 = vunpack.c.h.b16 %v262
        %v403 = vunpack.c.l.b16 %v263
        %v404 = vunpack.c.h.b16 %v263
        %v405 = vunpack.c.l.b16 %v264
        %v406 = vunpack.c.h.b16 %v264
        %v407 = vunpack.c.l.b16 %v265
        %v408 = vunpack.c.h.b16 %v265
        %v409 = vunpack.c.l.b16 %v266
        %v410 = vunpack.c.h.b16 %v266
        %v411 = vunpack.c.l.b16 %v267
        %v412 = vunpack.c.h.b16 %v267
        %v413 = vunpack.c.l.b16 %v268
        %v414 = vunpack.c.h.b16 %v268
        %v415 = vunpack.c.l.b16 %v269
        %v416 = vunpack.c.h.b16 %v269
        %v417 = vunpack.c.l.b16 %v270
        %v418 = vunpack.c.h.b16 %v270
        %v419 = vunpack.c.l.b16 %v271
        %v420 = vunpack.c.h.b16 %v271
        %v421 = vunpack.c.l.b16 %v272
        %v422 = vunpack.c.h.b16 %v272
        %v423 = vunpack.c.l.b16 %v273
        %v424 = vunpack.c.h.b16 %v273
        %v425 = vunpack.c.l.b16 %v274
        %v426 = vunpack.c.h.b16 %v274
        %v427 = vunpack.c.l.b16 %v275
        %v428 = vunpack.c.h.b16 %v275
        %v429 = vunpack.c.l.b16 %v276
        %v430 = vunpack.c.h.b16 %v276
        %v431 = vunpack.c.l.b16 %v277
        %v432 = vunpack.c.h.b16 %v277
        %v433 = vunpack.c.l.b16 %v278
        %v434 = vunpack.c.h.b16 %v278
        %v435 = vunpack.c.l.b16 %v279
        %v436 = vunpack.c.h.b16 %v279
        %v437 = vunpack.c.l.b16 %v280
        %v438 = vunpack.c.h.b16 %v280
        %v439 = vunpack.c.l.b16 %v281
        %v440 = vunpack.c.h.b16 %v281
        %v441 = vunpack.c.l.b16 %v282
        %v442 = vunpack.c.h.b16 %v282
        %v443 = vunpack.c.l.b16 %v283
        %v444 = vunpack.c.h.b16 %v283
        %v445 = vunpack.c.l.b16 %v284
        %v446 = vunpack.c.h.b16 %v284
        %v447 = vunpack.c.l.b16 %v285
        %v448 = vunpack.c.h.b16 %v285
        %v449 = vunpack.c.l.b16 %v286
        %v450 = vunpack.c.h.b16 %v286
        %v451 = vunpack.c.l.b16 %v287
        %v452 = vunpack.c.h.b16 %v287
        %v453 = vunpack.c.l.b16 %v288
        %v454 = vunpack.c.h.b16 %v288
        %v455 = vunpack.c.l.b16 %v289
        %v456 = vunpack.c.h.b16 %v289
        %v457 = vunpack.c.l.b16 %v290
        %v458 = vunpack.c.h.b16 %v290
        %v459 = vunpack.c.l.b16 %v291
        %v460 = vunpack.c.h.b16 %v291
        %v461 = vunpack.c.l.b16 %v292
        %v462 = vunpack.c.h.b16 %v292
        %v463 = vunpack.c.l.b16 %v293
        %v464 = vunpack.c.h.b16 %v293
        %v465 = vunpack.c.l.b16 %v294
        %v466 = vunpack.c.h.b16 %v294
        %v467 = vunpack.c.l.b16 %v295
        %v468 = vunpack.c.h.b16 %v295
        %v469 = vunpack.c.l.b16 %v296
        %v470 = vunpack.c.h.b16 %v296
        %v471 = vunpack.c.l.b16 %v297
        %v472 = vunpack.c.h.b16 %v297
        %v473 = vunpack.c.l.b16 %v298
        %v474 = vunpack.c.h.b16 %v298
        %v475 = vunpack.c.l.b16 %v299
        %v476 = vunpack.c.h.b16 %v299
        %v477 = vunpack.c.l.b16 %v300
        %v478 = vunpack.c.h.b16 %v300
        %v479 = vunpack.c.l.b16 %v301
        %v480 = vunpack.c.h.b16 %v301
        %v481 = vunpack.c.l.b16 %v302
        %v482 = vunpack.c.h.b16 %v302
        %v483 = vunpack.c.l.b16 %v303
        %v484 = vunpack.c.h.b16 %v303
        %v485 = vunpack.c.l.b16 %v304
        %v486 = vunpack.c.h.b16 %v304
        %v487 = vunpack.c.l.b16 %v305
        %v488 = vunpack.c.h.b16 %v305
        %v489 = vunpack.c.l.b16 %v306
        %v490 = vunpack.c.h.b16 %v306
        %v491 = vunpack.c.l.b16 %v307
        %v492 = vunpack.c.h.b16 %v307
        %v493 = vunpack.c.l.b16 %v308
        %v494 = vunpack.c.h.b16 %v308
        %v495 = vunpack.c.l.b16 %v309
        %v496 = vunpack.c.h.b16 %v309
        %v497 = vunpack.c.l.b16 %v310
        %v498 = vunpack.c.h.b16 %v310
        %v499 = vunpack.c.l.b16 %v311
        %v500 = vunpack.c.h.b16 %v311
        %v501 = vunpack.c.l.b16 %v312
        %v502 = vunpack.c.h.b16 %v312
        %v503 = vunpack.c.l.b16 %v313
        %v504 = vunpack.c.h.b16 %v313
        %v505 = vunpack.c.l.b16 %v314
        %v506 = vunpack.c.h.b16 %v314
        %v507 = vpack.c.b16 %v383, %v379
        %v508 = vpack.c.b16 %v384, %v380
        %v509 = vpack.c.b16 %v385, %v381
        %v510 = vpack.c.b16 %v386, %v382
        %v511 = vpack.c.b16 %v391, %v387
        %v512 = vpack.c.b16 %v392, %v388
        %v513 = vpack.c.b16 %v393, %v389
        %v514 = vpack.c.b16 %v394, %v390
        %v515 = vpack.c.b16 %v399, %v395
        %v516 = vpack.c.b16 %v400, %v396
        %v517 = vpack.c.b16 %v401, %v397
        %v518 = vpack.c.b16 %v402, %v398
        %v519 = vpack.c.b16 %v407, %v403
        %v520 = vpack.c.b16 %v408, %v404
        %v521 = vpack.c.b16 %v409, %v405
        %v522 = vpack.c.b16 %v410, %v406
        %v523 = vpack.c.b16 %v415, %v411
        %v524 = vpack.c.b16 %v416, %v412
        %v525 = vpack.c.b16 %v417, %v413
        %v526 = vpack.c.b16 %v418, %v414
        %v527 = vpack.c.b16 %v423, %v419
        %v528 = vpack.c.b16 %v424, %v420
        %v529 = vpack.c.b16 %v425, %v421
        %v530 = vpack.c.b16 %v426, %v422
        %v531 = vpack.c.b16 %v431, %v427
        %v532 = vpack.c.b16 %v432, %v428
        %v533 = vpack.c.b16 %v433, %v429
        %v534 = vpack.c.b16 %v434, %v430
        %v535 = vpack.c.b16 %v439, %v435
        %v536 = vpack.c.b16 %v440, %v436
        %v537 = vpack.c.b16 %v441, %v437
        %v538 = vpack.c.b16 %v442, %v438
        %v539 = vpack.c.b16 %v447, %v443
        %v540 = vpack.c.b16 %v448, %v444
        %v541 = vpack.c.b16 %v449, %v445
        %v542 = vpack.c.b16 %v450, %v446
        %v543 = vpack.c.b16 %v455, %v451
        %v544 = vpack.c.b16 %v456, %v452
        %v545 = vpack.c.b16 %v457, %v453
        %v546 = vpack.c.b16 %v458, %v454
        %v547 = vpack.c.b16 %v463, %v459
        %v548 = vpack.c.b16 %v464, %v460
        %v549 = vpack.c.b16 %v465, %v461
        %v550 = vpack.c.b16 %v466, %v462
        %v551 = vpack.c.b16 %v471, %v467
        %v552 = vpack.c.b16 %v472, %v468
        %v553 = vpack.c.b16 %v473, %v469
        %v554 = vpack.c.b16 %v474, %v470
        %v555 = vpack.c.b16 %v479, %v475
        %v556 = vpack.c.b16 %v480, %v476
        %v557 = vpack.c.b16 %v481, %v477
        %v558 = vpack.c.b16 %v482, %v478
        %v559 = vpack.c.b16 %v487, %v483
        %v560 = vpack.c.b16 %v488, %v484
        %v561 = vpack.c.b16 %v489, %v485
        %v562 = vpack.c.b16 %v490, %v486
        %v563 = vpack.c.b16 %v495, %v491
        %v564 = vpack.c.b16 %v496, %v492
        %v565 = vpack.c.b16 %v497, %v493
        %v566 = vpack.c.b16 %v498, %v494
        %v567 = vpack.c.b16 %v503, %v499
        %v568 = vpack.c.b16 %v504, %v500
        %v569 = vpack.c.b16 %v505, %v501
        %v570 = vpack.c.b16 %v506, %v502
        %635 = vmatprep.subr.bf16.mxu0 %v508
        %636 = vmatpush1.bf16.msra.mxu0 %v507
        %637 = vmatprep.subr.bf16.mxu0 %v512
        %638 = vmatpush1.bf16.msra.mxu0 %v511
        %639 = vmatprep.subr.bf16.mxu0 %v516
        %640 = vmatpush1.bf16.msra.mxu0 %v515
        %641 = vmatprep.subr.bf16.mxu0 %v520
        %642 = vmatpush1.bf16.msra.mxu0 %v519
        %643 = vmatprep.subr.bf16.mxu0 %v524
        %644 = vmatpush1.bf16.msra.mxu0 %v523
        %645 = vmatprep.subr.bf16.mxu0 %v528
        %646 = vmatpush1.bf16.msra.mxu0 %v527
        %647 = vmatprep.subr.bf16.mxu0 %v532
        %648 = vmatpush1.bf16.msra.mxu0 %v531
        %649 = vmatprep.subr.bf16.mxu0 %v536
        %650 = vmatpush1.bf16.msra.mxu0 %v535
        %651 = vmatprep.subr.bf16.mxu0 %v540
        %652 = vmatpush1.bf16.msra.mxu0 %v539
        %653 = vmatprep.subr.bf16.mxu0 %v544
        %654 = vmatpush1.bf16.msra.mxu0 %v543
        %655 = vmatprep.subr.bf16.mxu0 %v548
        %656 = vmatpush1.bf16.msra.mxu0 %v547
        %657 = vmatprep.subr.bf16.mxu0 %v552
        %658 = vmatpush1.bf16.msra.mxu0 %v551
        %659 = vmatprep.subr.bf16.mxu0 %v556
        %660 = vmatpush1.bf16.msra.mxu0 %v555
        %661 = vmatprep.subr.bf16.mxu0 %v560
        %662 = vmatpush1.bf16.msra.mxu0 %v559
        %663 = vmatprep.subr.bf16.mxu0 %v564
        %664 = vmatpush1.bf16.msra.mxu0 %v563
        %665 = vmatprep.subr.bf16.mxu0 %v568
        %666 = vmatpush1.bf16.msra.mxu0 %v567
        %667 = vmatprep.mubr.bf16.mxu0 %v250
        %668 = vmatmul.mubr.bf16.gmra.mrb[0].mxu0 %v248
        %v669 = vpop.f32.mrb[0].mxu0
        %v670 = vadd.f32 0.0, %v669
        %v671 = vpop.f32.mrb[0].mxu0
        %v672 = vadd.f32 0.0, %v671
        %v673 = vpop.f32.mrb[0].mxu0
        %v674 = vpop.f32.mrb[0].mxu0
        %675 = vdwg.mxu0
        %676 = vmatprep.subr.bf16.mxu0 %v510
        %677 = vmatpush1.bf16.msra.mxu0 %v509
        %678 = vmatprep.subr.bf16.mxu0 %v514
        %679 = vmatpush1.bf16.msra.mxu0 %v513
        %680 = vmatprep.subr.bf16.mxu0 %v518
        %681 = vmatpush1.bf16.msra.mxu0 %v517
        %682 = vmatprep.subr.bf16.mxu0 %v522
        %683 = vmatpush1.bf16.msra.mxu0 %v521
        %684 = vmatprep.subr.bf16.mxu0 %v526
        %685 = vmatpush1.bf16.msra.mxu0 %v525
        %686 = vmatprep.subr.bf16.mxu0 %v530
        %687 = vmatpush1.bf16.msra.mxu0 %v529
        %688 = vmatprep.subr.bf16.mxu0 %v534
        %689 = vmatpush1.bf16.msra.mxu0 %v533
        %690 = vmatprep.subr.bf16.mxu0 %v538
        %691 = vmatpush1.bf16.msra.mxu0 %v537
        %692 = vmatprep.subr.bf16.mxu0 %v542
        %693 = vmatpush1.bf16.msra.mxu0 %v541
        %694 = vmatprep.subr.bf16.mxu0 %v546
        %695 = vmatpush1.bf16.msra.mxu0 %v545
        %696 = vmatprep.subr.bf16.mxu0 %v550
        %697 = vmatpush1.bf16.msra.mxu0 %v549
        %698 = vmatprep.subr.bf16.mxu0 %v554
        %699 = vmatpush1.bf16.msra.mxu0 %v553
        %700 = vmatprep.subr.bf16.mxu0 %v558
        %701 = vmatpush1.bf16.msra.mxu0 %v557
        %702 = vmatprep.subr.bf16.mxu0 %v562
        %703 = vmatpush1.bf16.msra.mxu0 %v561
        %704 = vmatprep.subr.bf16.mxu0 %v566
        %705 = vmatpush1.bf16.msra.mxu0 %v565
        %706 = vmatprep.subr.bf16.mxu0 %v570
        %707 = vmatpush1.bf16.msra.mxu0 %v569
        %708 = vmatprep.mubr.bf16.mxu0 %v250
        %709 = vmatmul.mubr.bf16.gmra.mrb[0].mxu0 %v248
        %v710 = vpop.f32.mrb[0].mxu0
        %v711 = vadd.f32 0.0, %v710
        %v712 = vpop.f32.mrb[0].mxu0
        %v713 = vadd.f32 0.0, %v712
        %v714 = vpop.f32.mrb[0].mxu0
        %v715 = vpop.f32.mrb[0].mxu0
        %716 = vdwg.mxu0
        %v717 = vpack.c.bf16 %v670, %v670
        %v718 = vpack.c.bf16 %v672, %v672
        %v719 = vpack.c.bf16 %v711, %v711
        %v720 = vpack.c.bf16 %v713, %v713
        %v723 = vrot.slane %v719, 4
        %v724 = vrot.slane %v720, 4
        %vm725 = vcmask 1043456
        %v728 = vsel %vm725, %v717, %v723
        %v732 = vsel %vm725, %v718, %v724
        %v734 = vld [vmem:[#allocation5] sm:$0xf]
        %v735 = vld [vmem:[#allocation5 + $0x4] sm:$0xf]
        %v738 = vunpack.c.l.b16 %v734
        %v739 = vunpack.c.l.b16 %v735
        %v740 = vpack.c.b16 %v739, %v738
        %vm741 = vcmask 195584
        %v743 = vsel %vm741, %v740, 0
        %v746 = vsel %vm725, %v248, 0
        %v749 = vsel %vm725, %v250, 0
        %751 = vmatprep.subr.bf16.mxu0 %v732
        %752 = vmatpush1.bf16.msra.mxu0 %v728
        %753 = vmatprep.subr.bf16.mxu0 %v749
        %754 = vmatpush1.bf16.msra.mxu0 %v746
        %755 = vmatprep.subr.bf16.mxu0 0
        %756 = vmatpush1.bf16.msra.mxu0 0
        %757 = vmatprep.subr.bf16.mxu0 0
        %758 = vmatpush1.bf16.msra.mxu0 0
        %759 = vmatprep.subr.bf16.mxu0 0
        %760 = vmatpush1.bf16.msra.mxu0 0
        %761 = vmatprep.subr.bf16.mxu0 0
        %762 = vmatpush1.bf16.msra.mxu0 0
        %763 = vmatprep.subr.bf16.mxu0 0
        %764 = vmatpush1.bf16.msra.mxu0 0
        %765 = vmatprep.subr.bf16.mxu0 0
        %766 = vmatpush1.bf16.msra.mxu0 0
        %767 = vmatprep.subr.bf16.mxu0 0
        %768 = vmatpush1.bf16.msra.mxu0 0
        %769 = vmatprep.subr.bf16.mxu0 0
        %770 = vmatpush1.bf16.msra.mxu0 0
        %771 = vmatprep.subr.bf16.mxu0 0
        %772 = vmatpush1.bf16.msra.mxu0 0
        %773 = vmatprep.subr.bf16.mxu0 0
        %774 = vmatpush1.bf16.msra.mxu0 0
        %775 = vmatprep.subr.bf16.mxu0 0
        %776 = vmatpush1.bf16.msra.mxu0 0
        %777 = vmatprep.subr.bf16.mxu0 0
        %778 = vmatpush1.bf16.msra.mxu0 0
        %779 = vmatprep.subr.bf16.mxu0 0
        %780 = vmatpush1.bf16.msra.mxu0 0
        %781 = vmatprep.subr.bf16.mxu0 0
        %782 = vmatpush1.bf16.msra.mxu0 0
        %783 = vmatprep.mubr.bf16.mxu0 0
        %784 = vmatmul.mubr.bf16.gmra.mrb[0].mxu0 %v743
        %v785 = vpop.f32.mrb[0].mxu0
        %v786 = vadd.f32 0.0, %v785
        %v787 = vpop.f32.mrb[0].mxu0
        %v788 = vadd.f32 0.0, %v787
        %v789 = vpop.f32.mrb[0].mxu0
        %v790 = vadd.f32 0.0, %v789
        %v791 = vpop.f32.mrb[0].mxu0
        %v792 = vadd.f32 0.0, %v791
        %793 = vdwg.mxu0
        %v794 = vmax.f32 %v786, 0.0
        %v795 = vmax.f32 %v788, 0.0
        %v796 = vlaneseq
        %v797 = vand.u32 %v796, 127
        %v798 = vadd.s32 %v797, 128
        %vm799 = vcmp.lt.s32.totalorder %v797, 0
        %v800 = vsub.s32 0, %v797
        %v801 = vsel %vm799, %v800, %v797
        %v802 = vshrl.u32 %v801, 7
        %v803 = vand.u32 %v801, 127
        %v804 = vsub.s32 0, %v803
        %v805 = vsel %vm799, %v804, %v803
        %vm806 = vcmp.lt.s32.totalorder %v798, 0
        %v807 = vsub.s32 0, %v798
        %v808 = vsel %vm806, %v807, %v798
        %v809 = vshrl.u32 %v808, 7
        %v810 = vand.u32 %v808, 127
        %v811 = vsub.s32 0, %v810
        %v812 = vsel %vm806, %v811, %v810
        %vm813 = vcmp.ne.s32.totalorder %v805, 0
        %vm814 = vcmp.ne.s32.totalorder %v812, 0
        %vm815 = vcmp.lt.s32.totalorder %v805, 0
        %vm816 = vcmp.lt.s32.totalorder %v812, 0
        %vm817 = vmand %vm815, %vm813
        %vm818 = vmand %vm816, %vm814
        %v819 = vadd.s32 %v805, 128
        %v820 = vadd.s32 %v812, 128
        %v821 = vsel %vm817, %v819, %v805
        %v822 = vsel %vm818, %v820, %v812
        %823 = vrot.lane.b32.xlu0 %v794, 16
        %v824 = vpop.permute.xlu0 %823
        %825 = vrot.lane.b32.xlu0 %v795, 16
        %v826 = vpop.permute.xlu0 %825
        %vm827 = vcmp.lt.s32.totalorder %v797, 16
        %v828 = vsel %vm827, %v824, %v826
        %v829 = vsel %vm827, %v826, %v824
        %vm830 = vcmp.ge.s32.totalorder %v821, 16
        %vm831 = vcmp.ge.s32.totalorder %v822, 16
        %v832 = vsel %vm830, %v829, 0.0
        %v833 = vsel %vm831, %v828, 0.0
        %834 = vrot.lane.b32.xlu0 %v794, 112
        %v835 = vpop.permute.xlu0 %834
        %836 = vrot.lane.b32.xlu0 %v795, 112
        %v837 = vpop.permute.xlu0 %836
        %vm838 = vcmp.lt.s32.totalorder %v797, 112
        %v839 = vsel %vm838, %v835, %v837
        %v840 = vsel %vm838, %v837, %v835
        %vm841 = vcmp.lt.s32.totalorder %v821, 112
        %vm842 = vcmp.lt.s32.totalorder %v822, 112
        %v843 = vsel %vm841, %v839, 0.0
        %v844 = vsel %vm842, %v840, 0.0
        %v845 = vpack.c.bf16 %v794, %v832
        %v846 = vpack.c.bf16 %v795, %v833
        %v847 = vpack.c.bf16 1.0, %v843
        %v848 = vpack.c.bf16 1.0, %v844
        %v849 = vld [vmem:[%s2] sm:$0xf]
        %vm850 = vcmask 203776
        %v852 = vsel %vm850, %v849, 0
        %vm854 = vcmask 1044480
        %v855 = vsel %vm725, 4294967295, 65535
        %v856 = vsel %vm854, %v855, 0
        %v858 = vand.u32 %v847, %v856
        %v861 = vand.u32 %v848, %v856
        %863 = vmatprep.subr.bf16.mxu0 %v846
        %864 = vmatpush1.bf16.msra.mxu0 %v845
        %865 = vmatprep.subr.bf16.mxu0 %v861
        %866 = vmatpush1.bf16.msra.mxu0 %v858
        %867 = vmatprep.subr.bf16.mxu0 0
        %868 = vmatpush1.bf16.msra.mxu0 0
        %869 = vmatprep.subr.bf16.mxu0 0
        %870 = vmatpush1.bf16.msra.mxu0 0
        %871 = vmatprep.subr.bf16.mxu0 0
        %872 = vmatpush1.bf16.msra.mxu0 0
        %873 = vmatprep.subr.bf16.mxu0 0
        %874 = vmatpush1.bf16.msra.mxu0 0
        %875 = vmatprep.subr.bf16.mxu0 0
        %876 = vmatpush1.bf16.msra.mxu0 0
        %877 = vmatprep.subr.bf16.mxu0 0
        %878 = vmatpush1.bf16.msra.mxu0 0
        %879 = vmatprep.subr.bf16.mxu0 0
        %880 = vmatpush1.bf16.msra.mxu0 0
        %881 = vmatprep.subr.bf16.mxu0 0
        %882 = vmatpush1.bf16.msra.mxu0 0
        %883 = vmatprep.subr.bf16.mxu0 0
        %884 = vmatpush1.bf16.msra.mxu0 0
        %885 = vmatprep.subr.bf16.mxu0 0
        %886 = vmatpush1.bf16.msra.mxu0 0
        %887 = vmatprep.subr.bf16.mxu0 0
        %888 = vmatpush1.bf16.msra.mxu0 0
        %889 = vmatprep.subr.bf16.mxu0 0
        %890 = vmatpush1.bf16.msra.mxu0 0
        %891 = vmatprep.subr.bf16.mxu0 0
        %892 = vmatpush1.bf16.msra.mxu0 0
        %893 = vmatprep.subr.bf16.mxu0 0
        %894 = vmatpush1.bf16.msra.mxu0 0
        %895 = vmatprep.mubr.bf16.mxu0 0
        %896 = vmatmul.mubr.bf16.gmra.mrb[0].mxu0 %v852
        %v897 = vpop.f32.mrb[0].mxu0
        %v898 = vadd.f32 %v790, %v897
        %v899 = vpop.f32.mrb[0].mxu0
        %v900 = vadd.f32 %v792, %v899
        %v901 = vpop.f32.mrb[0].mxu0
        %v902 = vpop.f32.mrb[0].mxu0
        %903 = vdwg.mxu0
        %v904 = vmax.f32 %v898, 0.0
        %v905 = vmax.f32 %v900, 0.0
        %906 = vst [vmem:[%s244] sm:$0xff] %v904
        %s907 = scalar_lea.vmem %s244, 8 [#allocation8]
        %908 = vst [vmem:[%s907] sm:$0xff] %v905
        %s909 = sand.u32 %s119, 1
        %s910 = scalar_lea.sflag [#allocation4], %s909
        %s911 = sand.u32 %s119, 1
        %s912 = smul.addr %s911, 16
        %s913 = scalar_lea.vmem [#allocation8], %s912
        // Predicated region
        $region49: #{tpu_custom_call.1} parent=35 // pred_check
          %p914 = pneg %p129
        $region50: #{tpu_custom_call.1} parent=35 // pred_check_branch
          %916 = sbr.rel (%p914) target = $region52
        $region51: #{tpu_custom_call.1} parent=35 // pred_region
          %s917 = smul.u32 2, %s22
          %s919 = ssub.s32 256, 256
          %920 = vsyncadd %s910, %s919
          %s921 = smul.addr %s917, 128
          %s922 = scalar_lea.hbm %s4, %s921
          %s923 = sshll.u32 %s913, 4
          %s924 = int_to_ptr.vmem [resolvable:$true] %s923
          %929 = dma.vmem_to_hbm [thread:$0]  %s924, 256, %s922, %s910, 128, 128, 8
        $region52: #{tpu_custom_call.1} parent=35 // pred_fallthru
          _
      $region36: #{tpu_custom_call.1} parent=5 // pred_fallthru
        _
      %p930 = scmp.le.s32.totalorder 2, %s17
      // Predicated region
      $region53: #{tpu_custom_call.1} parent=5 // pred_check
        %p931 = pneg %p930
      $region54: #{tpu_custom_call.1} parent=5 // pred_check_branch
        %933 = sbr.rel (%p931) target = $region56
      $region55: #{tpu_custom_call.1} parent=5 // pred_region
        %s934 = ssub.s32 %s17, 2
        // Predicated region
        $region57: #{tpu_custom_call.1} parent=55 // pred_check
          %p935 = pneg %p135
        $region58: #{tpu_custom_call.1} parent=55 // pred_check_branch
          %937 = sbr.rel (%p935) target = $region60
        $region59: #{tpu_custom_call.1} parent=55 // pred_region
          %s938 = sand.u32 %s120, 1
          %s939 = scalar_lea.sflag [#allocation4], %s938
          %s940 = sand.u32 %s120, 1
          %s941 = smul.addr %s940, 16
          %s942 = scalar_lea.vmem [#allocation8], %s941
          %943 = dma.done %s939, 256
        $region60: #{tpu_custom_call.1} parent=55 // pred_fallthru
          _
      $region56: #{tpu_custom_call.1} parent=5 // pred_fallthru
        _
    $region6: #{tpu_custom_call.1} parent=1 // loop_footer
      %s21 = sadd.s32 1, %s17
    $region7: #{tpu_custom_call.1} parent=1 // loop_footer_branch
      %16 = sbr.rel target = $region3
    $region8: #{tpu_custom_call.1} parent=1 // loop_exit
      _
    %944 = vsyncpa [#allocation3], 1
    %s945 = scalar_lea.sflag [#allocation3], 1
    %946 = vsyncpa %s945, 1
    %947 = vsyncpa [#allocation6], 1
    %948 = vsyncpa [#allocation4], 1
    %s949 = scalar_lea.sflag [#allocation4], 1
    %950 = vsyncpa %s949, 1

</llo_original>
